<compile_context>
chip_gen: v7x
topology: tpu7x:2x2x1
jax: 0.10.0
libtpu: 0.0.40
codegen_flags: <defaults>
</compile_context>

<pallas_src>
import jax
import jax.numpy as jnp
from jax import lax
from jax.experimental import pallas as pl
from jax.experimental.pallas import tpu as pltpu

BN_EPS = 1e-5    # ConvBnRelu default bn_eps
ATT_EPS = 1e-6   # Attention eps


def _vmem_budget_bytes():
    """~75% of physical VMEM (v5e/v6e: 128 MiB, v7x: 64 MiB), with a conservative fallback."""
    cap = None
    try:
        cap = getattr(pltpu.get_tpu_info(), "vmem_capacity_bytes", None)
    except Exception:
        cap = None
    if not cap:
        cap = 64 * 1024 * 1024                      # assume v7x-sized VMEM if unknown
    return int(min(cap * 3 // 4, 100 * 1024 * 1024))


def _pick_batch_tile(batch, cin, cout, cq_p, n, out_itemsize, vmem_budget):
    """Group batches per grid step (amortize ~0.35us/step + per-step weight pushes).

    Small tiles (<=4) keep DMA/compute overlap healthy on single-TC chips; the VMEM budget caps
    block bytes (v7x has only 64 MiB); the grid is kept >= 2 steps so megacore sharding has work.
    Guarantees batch % b_tile == 0.
    """
    def step_bytes(bt):
        m = bt * n
        in_b = 2 * cin * m * 2                                   # double-buffered bf16 input
        out_b = 2 * cout * m * out_itemsize                      # double-buffered output
        interm = (2 * cout + (2 * cq_p + cout) + 2 * cq_p + 2) * m * 4   # live f32 values
        weights = (cout * cin + (2 * cq_p + cout) * (cout + 1)) * 2
        return in_b + out_b + interm + weights

    best = 1
    for bt in (2, 4):
        if batch % bt != 0 or batch // bt < 2:
            continue
        if n % 128 != 0:          # per-batch lane slices must stay tile-aligned free views
            continue
        if step_bytes(bt) <= vmem_budget:
            best = bt
    return best


def _make_aam_kernel(cq_p, cout, n, b_tile):
    n_f = float(n)

    def kernel(x_ref, wcb_ref, bcb_ref, wqkv_ref, bqkv_ref, o_ref):
        # ---- projections over the whole batch group: one MXU weight push per weight per step ----
        # ConvBnRelu: 1x1 conv with eval-mode BN folded into weight/shift, then ReLU.
        feat = jnp.dot(wcb_ref[...], x_ref[0],
                       preferred_element_type=jnp.float32) + bcb_ref[...]
        feat = jnp.maximum(feat, 0.0)                                   # (Cout, b_tile*N) f32
        # Fused stacked Q/K/V projection (gamma pre-folded into the V rows).
        qkv = jnp.dot(wqkv_ref[...], feat.astype(jnp.bfloat16),
                      preferred_element_type=jnp.float32) + bqkv_ref[...]   # (2cq_p+Cout, b_tile*N)

        # ---- per-batch norm / attention math; static lane slices are free views ----
        for i in range(b_tile):
            sl = slice(i * n, (i + 1) * n)
            q = qkv[:cq_p, sl]                     # (cq_p, N)
            k = qkv[cq_p:2 * cq_p, sl]             # (cq_p, N)
            v = qkv[2 * cq_p:, sl]                 # (Cout, N)  (already gamma-scaled)
            f_i = feat[:, sl]                      # (Cout, N)

            # l2_norm over channels (tiny guard only changes exactly-zero columns, NaN in torch).
            qn = q * lax.rsqrt(jnp.maximum(jnp.sum(q * q, axis=0, keepdims=True), 1e-30))
            kn = k * lax.rsqrt(jnp.maximum(jnp.sum(k * k, axis=0, keepdims=True), 1e-30))

            # tailor[n] = 1 / (N + sum_c Qn[c,n] * (sum_n Kn[c,n] + eps))
            k_sum = jnp.sum(kn, axis=1, keepdims=True)                   # (cq_p, 1) lane reduce
            denom = n_f + jnp.sum(qn * (k_sum + ATT_EPS), axis=0, keepdims=True)
            tailor = pl.reciprocal(denom, approx=True)                   # (1, N)  EUP slot

            # value_sum via lane-axis reduce (XLU slot, free next to MXU/VPU work).
            v_sum = jnp.sum(v, axis=1, keepdims=True)                    # (Cout, 1)

            kn_bf = kn.astype(jnp.bfloat16)
            qn_bf = qn.astype(jnp.bfloat16)
            # matrix_t[c,m] = sum_n V[c,n] * Kn[m,n]   (== torch "matrix"[m,c])
            matrix_t = lax.dot_general(v.astype(jnp.bfloat16), kn_bf,
                                       (((1,), (1,)), ((), ())),
                                       preferred_element_type=jnp.float32)   # (Cout, cq_p)
            # qmat[c,n] = sum_m matrix_t[c,m] * Qn[m,n]
            qmat = jnp.dot(matrix_t.astype(jnp.bfloat16), qn_bf,
                           preferred_element_type=jnp.float32)               # (Cout, N)

            # atten (gamma folded into V) + residual feat; store in output dtype (bf16 by default).
            o_ref[0, :, sl] = ((qmat + v_sum) * tailor + f_i).astype(o_ref.dtype)

    return kernel


def attention_aggregation(xs, params, out_dtype=jnp.bfloat16):
    fcat = jnp.concatenate([jnp.asarray(t, jnp.float32) for t in xs], axis=1)   # NCHW concat
    B, Cin, H, W = fcat.shape
    N = H * W

    # Fold BatchNorm (eval-mode, running stats) into the 1x1 conv.
    # TODO(synk): training-mode BN (batch statistics) is not implemented; eval-mode semantics used.
    bn_scale = params["bn_gamma"] / jnp.sqrt(params["bn_var"] + BN_EPS)
    bn_shift = params["bn_beta"] - params["bn_mean"] * bn_scale
    wcb = (params["convblk_w"] * bn_scale[:, None]).astype(jnp.bfloat16)        # (Cout, Cin)
    bcb = bn_shift[:, None].astype(jnp.float32)                                 # (Cout, 1)

    cq = params["wq"].shape[0]
    cout = params["wv"].shape[0]
    cq_p = ((cq + 7) // 8) * 8       # pad Cq so in-kernel sublane slices stay free aligned views

    def pad_rows(a, rows):
        return jnp.pad(a, ((0, rows - a.shape[0]),) + ((0, 0),) * (a.ndim - 1))

    # Stack (padded) Q/K weights and gamma-folded V weights into one matmul operand.
    gamma = params["gamma"].reshape(())
    w_qkv = jnp.concatenate([pad_rows(params["wq"], cq_p),
                             pad_rows(params["wk"], cq_p),
                             gamma * params["wv"]], axis=0).astype(jnp.bfloat16)  # (2cq_p+Cout, Cout)
    b_qkv = jnp.concatenate([pad_rows(params["bq"], cq_p),
                             pad_rows(params["bk"], cq_p),
                             gamma * params["bv"]], axis=0)[:, None].astype(jnp.float32)

    vmem_budget = _vmem_budget_bytes()
    out_itemsize = jnp.dtype(out_dtype).itemsize
    b_tile = _pick_batch_tile(B, Cin, cout, cq_p, N, out_itemsize, vmem_budget)
    G = B // b_tile
    M = b_tile * N

    # bf16 input halves kernel input DMA; cast + batch-group rearrange fuse with the concat copy.
    x = fcat.reshape(B, Cin, N).astype(jnp.bfloat16)
    if b_tile > 1:
        x = x.reshape(G, b_tile, Cin, N).transpose(0, 2, 1, 3)
    x = x.reshape(G, Cin, M)

    # TODO(synk): very large H*W on v7x (64 MiB VMEM) needs a two-pass N-tiled variant
    # (accumulate k_sum / value_sum / K.V^T per N-tile, then a Q-side pass); this single-N-block
    # design targets moderate feature maps.
    out = pl.pallas_call(
        _make_aam_kernel(cq_p, cout, N, b_tile),
        out_shape=jax.ShapeDtypeStruct((G, cout, M), out_dtype),
        grid_spec=pltpu.PrefetchScalarGridSpec(
            num_scalar_prefetch=0,
            grid=(G,),
            in_specs=[
                pl.BlockSpec((1, Cin, M), lambda g: (g, 0, 0)),             # batch-group input
                pl.BlockSpec((cout, Cin), lambda g: (0, 0)),                # folded conv+BN weight
                pl.BlockSpec((cout, 1), lambda g: (0, 0)),                  # folded BN shift
                pl.BlockSpec((2 * cq_p + cout, cout), lambda g: (0, 0)),    # stacked Wq/Wk/gamma*Wv
                pl.BlockSpec((2 * cq_p + cout, 1), lambda g: (0, 0)),       # stacked biases
            ],
            out_specs=pl.BlockSpec((1, cout, M), lambda g: (g, 0, 0)),
        ),
        compiler_params=pltpu.CompilerParams(
            dimension_semantics=("parallel",),
            vmem_limit_bytes=vmem_budget,
        ),
    )(x, wcb, bcb, w_qkv, b_qkv)

    if b_tile > 1:
        out = out.reshape(G, cout, b_tile, N).transpose(0, 2, 1, 3)
    return out.reshape(B, cout, H, W)


def reference(xs, params):
    """Pure-JAX f32 mirror of the PyTorch forward (eval-mode BN)."""
    fcat = jnp.concatenate(xs, axis=1)
    B, Cin, H, W = fcat.shape
    N = H * W
    x = fcat.reshape(B, Cin, N)

    feat = jnp.einsum('oc,bcn->bon', params["convblk_w"], x)
    scale = params["bn_gamma"] / jnp.sqrt(params["bn_var"] + BN_EPS)
    shift = params["bn_beta"] - params["bn_mean"] * scale
    feat = jnp.maximum(feat * scale[None, :, None] + shift[None, :, None], 0.0)  # (B, Cout, N)

    Q = jnp.einsum('oc,bcn->bon', params["wq"], feat) + params["bq"][None, :, None]
    K = jnp.einsum('oc,bcn->bon', params["wk"], feat) + params["bk"][None, :, None]
    V = jnp.einsum('oc,bcn->bon', params["wv"], feat) + params["bv"][None, :, None]

    Qn = Q * (1.0 / jnp.linalg.norm(Q, axis=-2, keepdims=True))
    Kn = K * (1.0 / jnp.linalg.norm(K, axis=-2, keepdims=True))
    Qp = jnp.transpose(Qn, (0, 2, 1))                                            # (B, N, Cq)

    tailor = 1.0 / (N + jnp.einsum('bnc,bc->bn', Qp, jnp.sum(Kn, axis=-1) + ATT_EPS))
    value_sum = jnp.sum(V, axis=-1)[:, :, None]                                  # (B, Cout, 1)
    matrix = jnp.einsum('bmn,bcn->bmc', Kn, V)                                   # (B, Cq, Cout)
    matrix_sum = value_sum + jnp.einsum('bnm,bmc->bcn', Qp, matrix)
    weight_value = matrix_sum * tailor[:, None, :]
    atten = params["gamma"].reshape(1, 1, 1) * weight_value
    return (atten + feat).reshape(B, -1, H, W)


def make_params(key, in_chan, out_chan, scale=8):
    cq = out_chan // scale
    ks = jax.random.split(key, 10)
    p = {
        "convblk_w": 0.1 * jax.random.normal(ks[0], (out_chan, in_chan), jnp.float32),
        "bn_gamma": 1.0 + 0.1 * jax.random.normal(ks[1], (out_chan,), jnp.float32),
        "bn_beta": 0.1 * jax.random.normal(ks[2], (out_chan,), jnp.float32),
        "bn_mean": 0.1 * jax.random.normal(ks[3], (out_chan,), jnp.float32),
        "bn_var": 0.5 + jnp.abs(jax.random.normal(ks[4], (out_chan,), jnp.float32)),
        "wq": 0.1 * jax.random.normal(ks[5], (cq, out_chan), jnp.float32),
        "bq": 0.1 * jax.random.normal(ks[6], (cq,), jnp.float32),
        "wk": 0.1 * jax.random.normal(ks[7], (cq, out_chan), jnp.float32),
        "bk": 0.1 * jax.random.normal(ks[8], (cq,), jnp.float32),
        "wv": 0.1 * jax.random.normal(ks[9], (out_chan, out_chan), jnp.float32),
        "bv": 0.05 * jnp.ones((out_chan,), jnp.float32),
        # nn.Parameter(torch.zeros(1)) in __init__; set nonzero here so the
        # attention branch actually contributes to the output under test.
        "gamma": jnp.array([0.5], jnp.float32),
    }
    return p


if __name__ == "__main__":
    key = jax.random.PRNGKey(0)
    k0, k1, kp = jax.random.split(key, 3)

    # Two feature maps concatenated along channels: in_chan = 64, out_chan = 64, Cq = 8.
    B, C_half, S = 2, 32, 16
    x0 = jax.random.normal(k0, (B, C_half, S, S), jnp.float32)   # NCHW
    x1 = jax.random.normal(k1, (B, C_half, S, S), jnp.float32)   # NCHW

    params = make_params(kp, in_chan=2 * C_half, out_chan=64, scale=8)

    out = attention_aggregation([x0, x1], params)                # bf16 output by default
    out = jax.block_until_ready(out)

    ref = jax.block_until_ready(reference([x0, x1], params))
    assert out.shape == ref.shape == (B, 64, S, S)
    out_f32 = out.astype(jnp.float32)
    max_err = float(jnp.max(jnp.abs(out_f32 - ref)))
    assert jnp.allclose(out_f32, ref, rtol=2e-2, atol=2e-2), max_err

    print("KERNEL_OK")
</pallas_src>

<mosaic_0001>
module attributes {stable_mosaic.version = 11 : i64} {
  func.func @kernel(%arg0: i32, %arg1: memref<1x64x256xbf16, #tpu.memory_space<vmem>>, %arg2: memref<64x64xbf16, #tpu.memory_space<vmem>>, %arg3: memref<64x1xf32, #tpu.memory_space<vmem>>, %arg4: memref<80x64xbf16, #tpu.memory_space<vmem>>, %arg5: memref<80x1xf32, #tpu.memory_space<vmem>>, %arg6: memref<1x64x256xbf16, #tpu.memory_space<vmem>>) attributes {dimension_semantics = [#tpu.dimension_semantics<parallel>], iteration_bounds = array<i64: 2>, scalar_prefetch = 0 : i64, scratch_operands = 0 : i64, tpu.core_type = #tpu.core_type<tc>, window_params = [{transform_indices = @transform_0, window_bounds = array<i64: 1, 64, 256>}, {pipeline_mode = #tpu.pipeline_mode<synchronous>, transform_indices = @transform_1, window_bounds = array<i64: 64, 64>}, {pipeline_mode = #tpu.pipeline_mode<synchronous>, transform_indices = @transform_2, window_bounds = array<i64: 64, 1>}, {pipeline_mode = #tpu.pipeline_mode<synchronous>, transform_indices = @transform_3, window_bounds = array<i64: 80, 64>}, {pipeline_mode = #tpu.pipeline_mode<synchronous>, transform_indices = @transform_4, window_bounds = array<i64: 80, 1>}, {transform_indices = @transform_5, window_bounds = array<i64: 1, 64, 256>}]} {
    %c0 = arith.constant 0 : index
    %c0_0 = arith.constant 0 : index
    %0 = vector.load %arg2[%c0, %c0_0] : memref<64x64xbf16, #tpu.memory_space<vmem>>, vector<64x64xbf16>
    %c0_1 = arith.constant 0 : index
    %c0_2 = arith.constant 0 : index
    %c0_3 = arith.constant 0 : index
    %1 = vector.load %arg1[%c0_1, %c0_2, %c0_3] : memref<1x64x256xbf16, #tpu.memory_space<vmem>>, vector<1x64x256xbf16>
    %2 = vector.shape_cast %1 : vector<1x64x256xbf16> to vector<64x256xbf16>
    %cst = arith.constant dense<0.000000e+00> : vector<64x256xf32>
    %3 = tpu.matmul %0, %2, %cst {dimension_numbers = #tpu.dot_dimension_numbers<[1], [0], [0], [1], [0, 0, 1, 1], [], []>} : vector<64x64xbf16>, vector<64x256xbf16>, vector<64x256xf32> -> vector<64x256xf32>
    %c0_4 = arith.constant 0 : index
    %c0_5 = arith.constant 0 : index
    %4 = vector.load %arg3[%c0_4, %c0_5] : memref<64x1xf32, #tpu.memory_space<vmem>>, vector<64x1xf32>
    %5 = vector.broadcast %4 : vector<64x1xf32> to vector<64x256xf32>
    %6 = arith.addf %3, %5 : vector<64x256xf32>
    %cst_6 = arith.constant 0.000000e+00 : f32
    %7 = vector.broadcast %cst_6 : f32 to vector<64x256xf32>
    %8 = arith.maximumf %6, %7 : vector<64x256xf32>
    %c0_7 = arith.constant 0 : index
    %c0_8 = arith.constant 0 : index
    %9 = vector.load %arg4[%c0_7, %c0_8] : memref<80x64xbf16, #tpu.memory_space<vmem>>, vector<80x64xbf16>
    %10 = arith.truncf %8 : vector<64x256xf32> to vector<64x256xbf16>
    %cst_9 = arith.constant dense<0.000000e+00> : vector<80x256xf32>
    %11 = tpu.matmul %9, %10, %cst_9 {dimension_numbers = #tpu.dot_dimension_numbers<[1], [0], [0], [1], [0, 0, 1, 1], [], []>} : vector<80x64xbf16>, vector<64x256xbf16>, vector<80x256xf32> -> vector<80x256xf32>
    %c0_10 = arith.constant 0 : index
    %c0_11 = arith.constant 0 : index
    %12 = vector.load %arg5[%c0_10, %c0_11] : memref<80x1xf32, #tpu.memory_space<vmem>>, vector<80x1xf32>
    %13 = vector.broadcast %12 : vector<80x1xf32> to vector<80x256xf32>
    %14 = arith.addf %11, %13 : vector<80x256xf32>
    %15 = vector.extract_strided_slice %14 {offsets = [0, 0], sizes = [8, 256], strides = [1, 1]} : vector<80x256xf32> to vector<8x256xf32>
    %16 = vector.extract_strided_slice %14 {offsets = [8, 0], sizes = [8, 256], strides = [1, 1]} : vector<80x256xf32> to vector<8x256xf32>
    %17 = vector.extract_strided_slice %14 {offsets = [16, 0], sizes = [64, 256], strides = [1, 1]} : vector<80x256xf32> to vector<64x256xf32>
    %18 = arith.mulf %15, %15 : vector<8x256xf32>
    %cst_12 = arith.constant dense<0.000000e+00> : vector<256xf32>
    %19 = vector.multi_reduction <add>, %18, %cst_12 [0] : vector<8x256xf32> to vector<256xf32>
    %20 = vector.shape_cast %19 : vector<256xf32> to vector<1x256xf32>
    %cst_13 = arith.constant 1.000000e-30 : f32
    %21 = vector.broadcast %cst_13 : f32 to vector<1x256xf32>
    %22 = arith.maximumf %20, %21 : vector<1x256xf32>
    %23 = math.rsqrt %22 : vector<1x256xf32>
    %24 = vector.broadcast %23 : vector<1x256xf32> to vector<8x256xf32>
    %25 = arith.mulf %15, %24 : vector<8x256xf32>
    %26 = arith.mulf %16, %16 : vector<8x256xf32>
    %cst_14 = arith.constant dense<0.000000e+00> : vector<256xf32>
    %27 = vector.multi_reduction <add>, %26, %cst_14 [0] : vector<8x256xf32> to vector<256xf32>
    %28 = vector.shape_cast %27 : vector<256xf32> to vector<1x256xf32>
    %cst_15 = arith.constant 1.000000e-30 : f32
    %29 = vector.broadcast %cst_15 : f32 to vector<1x256xf32>
    %30 = arith.maximumf %28, %29 : vector<1x256xf32>
    %31 = math.rsqrt %30 : vector<1x256xf32>
    %32 = vector.broadcast %31 : vector<1x256xf32> to vector<8x256xf32>
    %33 = arith.mulf %16, %32 : vector<8x256xf32>
    %cst_16 = arith.constant dense<0.000000e+00> : vector<8xf32>
    %34 = vector.multi_reduction <add>, %33, %cst_16 [1] : vector<8x256xf32> to vector<8xf32>
    %35 = vector.shape_cast %34 : vector<8xf32> to vector<8x1xf32>
    %cst_17 = arith.constant 9.99999997E-7 : f32
    %36 = vector.broadcast %cst_17 : f32 to vector<8x1xf32>
    %37 = arith.addf %35, %36 : vector<8x1xf32>
    %38 = vector.broadcast %37 : vector<8x1xf32> to vector<8x256xf32>
    %39 = arith.mulf %25, %38 : vector<8x256xf32>
    %cst_18 = arith.constant dense<0.000000e+00> : vector<256xf32>
    %40 = vector.multi_reduction <add>, %39, %cst_18 [0] : vector<8x256xf32> to vector<256xf32>
    %41 = vector.shape_cast %40 : vector<256xf32> to vector<1x256xf32>
    %cst_19 = arith.constant 2.560000e+02 : f32
    %42 = vector.broadcast %cst_19 : f32 to vector<1x256xf32>
    %43 = arith.addf %42, %41 : vector<1x256xf32>
    %44 = tpu.reciprocal %43 {approx = true} : vector<1x256xf32> -> vector<1x256xf32>
    %cst_20 = arith.constant dense<0.000000e+00> : vector<64xf32>
    %45 = vector.multi_reduction <add>, %17, %cst_20 [1] : vector<64x256xf32> to vector<64xf32>
    %46 = vector.shape_cast %45 : vector<64xf32> to vector<64x1xf32>
    %47 = arith.truncf %33 : vector<8x256xf32> to vector<8x256xbf16>
    %48 = arith.truncf %25 : vector<8x256xf32> to vector<8x256xbf16>
    %49 = arith.truncf %17 : vector<64x256xf32> to vector<64x256xbf16>
    %cst_21 = arith.constant dense<0.000000e+00> : vector<64x8xf32>
    %50 = tpu.matmul %49, %47, %cst_21 {dimension_numbers = #tpu.dot_dimension_numbers<[1], [1], [0], [0], [0, 0, 1, 0], [], []>} : vector<64x256xbf16>, vector<8x256xbf16>, vector<64x8xf32> -> vector<64x8xf32>
    %51 = arith.truncf %50 : vector<64x8xf32> to vector<64x8xbf16>
    %cst_22 = arith.constant dense<0.000000e+00> : vector<64x256xf32>
    %52 = tpu.matmul %51, %48, %cst_22 {dimension_numbers = #tpu.dot_dimension_numbers<[1], [0], [0], [1], [0, 0, 1, 1], [], []>} : vector<64x8xbf16>, vector<8x256xbf16>, vector<64x256xf32> -> vector<64x256xf32>
    %53 = vector.broadcast %46 : vector<64x1xf32> to vector<64x256xf32>
    %54 = arith.addf %52, %53 : vector<64x256xf32>
    %55 = vector.broadcast %44 : vector<1x256xf32> to vector<64x256xf32>
    %56 = arith.mulf %54, %55 : vector<64x256xf32>
    %57 = arith.addf %56, %8 : vector<64x256xf32>
    %58 = arith.truncf %57 : vector<64x256xf32> to vector<64x256xbf16>
    %c0_23 = arith.constant 0 : index
    %c0_24 = arith.constant 0 : index
    %c0_25 = arith.constant 0 : index
    %59 = vector.load %arg6[%c0_23, %c0_24, %c0_25] : memref<1x64x256xbf16, #tpu.memory_space<vmem>>, vector<1x64x256xbf16>
    %60 = vector.shape_cast %59 : vector<1x64x256xbf16> to vector<64x256xbf16>
    %61 = vector.shape_cast %58 : vector<64x256xbf16> to vector<1x64x256xbf16>
    tpu.vector_store %arg6[%c0_23, %c0_24, %c0_25], %61 {strides = array<i32>} : memref<1x64x256xbf16, #tpu.memory_space<vmem>>, vector<1x64x256xbf16>,
    return
  }
  func.func @transform_0(%arg0: i32) -> (i32, i32, i32) {
    %c0_i32 = arith.constant 0 : i32
    %c0_i32_0 = arith.constant 0 : i32
    %c0_i32_1 = arith.constant 0 : i32
    return %arg0, %c0_i32, %c0_i32_0 : i32, i32, i32
  }
  func.func @transform_1(%arg0: i32) -> (i32, i32) {
    %c0_i32 = arith.constant 0 : i32
    %c0_i32_0 = arith.constant 0 : i32
    %c0_i32_1 = arith.constant 0 : i32
    return %c0_i32, %c0_i32_0 : i32, i32
  }
  func.func @transform_2(%arg0: i32) -> (i32, i32) {
    %c0_i32 = arith.constant 0 : i32
    %c0_i32_0 = arith.constant 0 : i32
    %c0_i32_1 = arith.constant 0 : i32
    return %c0_i32, %c0_i32_0 : i32, i32
  }
  func.func @transform_3(%arg0: i32) -> (i32, i32) {
    %c0_i32 = arith.constant 0 : i32
    %c0_i32_0 = arith.constant 0 : i32
    %c0_i32_1 = arith.constant 0 : i32
    return %c0_i32, %c0_i32_0 : i32, i32
  }
  func.func @transform_4(%arg0: i32) -> (i32, i32) {
    %c0_i32 = arith.constant 0 : i32
    %c0_i32_0 = arith.constant 0 : i32
    %c0_i32_1 = arith.constant 0 : i32
    return %c0_i32, %c0_i32_0 : i32, i32
  }
  func.func @transform_5(%arg0: i32) -> (i32, i32, i32) {
    %c0_i32 = arith.constant 0 : i32
    %c0_i32_0 = arith.constant 0 : i32
    %c0_i32_1 = arith.constant 0 : i32
    return %arg0, %c0_i32, %c0_i32_0 : i32, i32, i32
  }
}

</mosaic_0001>

<llo_original>
// kernel: tpu_custom_call.1
$region0: #{tpu_custom_call.1}
  #allocation0 [shape = 'u32[]', space=smem, size = 0x4, offset = 0x4, fixed_abs, tag = 'smem constant byte address 0x4 - core index']
  #allocation1 [shape = 'u32[144,128]{1,0:T(1,128)}', space=vmem, size = 0x12000, scoped, tag = 'internal scratch']
  %s0 = inlined_call_operand.vmem [shape: bf16[2,64,256], index: 0, kind: input, shape index: {}]
  %s1 = inlined_call_operand.vmem [shape: bf16[64,64], index: 1, kind: input, shape index: {}]
  %s2 = inlined_call_operand.vmem [shape: f32[64,1], index: 2, kind: input, shape index: {}]
  %s3 = inlined_call_operand.vmem [shape: bf16[80,64], index: 3, kind: input, shape index: {}]
  %s4 = inlined_call_operand.vmem [shape: f32[80,1], index: 4, kind: input, shape index: {}]
  %s5 = inlined_call_operand.hbm [shape: bf16[2,64,256], index: 5, kind: output, shape index: {}]
  %s6 = sld [smem:[#allocation0]]
  $region53: #{tpu_custom_call.1} parent=0
    _
  %s8 = ssub.s32 1, %s6
  %s9 = scalar_select 0, %s8, %s6
  $region1: #{tpu_custom_call.1} parent=0
    #allocation2 [shape = 'u8[65536]{0}', space=vmem, size = 0x10000, scoped, tag = 'output window, operand 0']
    #allocation3 [shape = 's32[2]{0}', space=sflag, size = 0x8, scoped, tag = 'scoped memory for tpu_custom_call.1']
    %10 = vsyncpa [#allocation3], 0
    %s11 = scalar_lea.sflag [#allocation3], 1
    %12 = vsyncpa %s11, 0
    loop: start=0, step=1, limit=4
    $region2: #{tpu_custom_call.1} parent=1 // loop_pre_header
      _
    $region3: #{tpu_custom_call.1} parent=1 // loop_header
      %s14 = sphi 0, %s18
      %p15 = scmp.ge.s32.totalorder %s14, 4
      %s24 = sphi 0, %s26
      %s27 = sphi 0, %s24
      %s28 = sphi 0, %s27
      %s44 = sphi 0, %s28
      %s48 = sphi 0, %s48
      %s50 = sphi 0, %s48
      %s51 = sphi 0, %s50
      %s65 = sphi 0, %s51
      %s69 = sphi 0, %s69
      %s71 = sphi 0, %s69
      %s72 = sphi 0, %s71
      %s86 = sphi 0, %s72
      %s90 = sphi 0, %s90
      %s92 = sphi 0, %s90
      %s93 = sphi 0, %s92
      %s107 = sphi 0, %s93
      %s111 = sphi 0, %s111
      %s113 = sphi 0, %s111
      %s114 = sphi 0, %s113
      %s128 = sphi 0, %s114
      %s134 = sphi 0, %s136
      %s137 = sphi 0, %s134
      %s138 = sphi 0, %s137
      %s154 = sphi 0, %s138
    $region4: #{tpu_custom_call.1} parent=1 // loop_header_branch
      %17 = sbr.rel (%p15) target = $region8
    $region5: #{tpu_custom_call.1} parent=1 // loop_body
      %s19 = ssub.s32 %s14, 1
      %s20 = ssub.s32 %s14, 2
      %s21 = sadd.s32 %s14, 1
      %s22 = ssub.s32 %s14, %s21
      %p23 = scmp.eq.s32.totalorder %s22, 0
      %s25 = sadd.s32 %s24, 1
      %s26 = scalar_select %p23, %s24, %s25
      %p29 = pneg %p23
      %p30 = scmp.eq.s32.totalorder %s14, 1
      %p31 = por %p29, %p30
      %p32 = scmp.ne.s32.totalorder %s24, %s27
      %p33 = scmp.eq.s32.totalorder %s14, 0
      %p34 = por %p32, %p33
      %p35 = scmp.ne.s32.totalorder %s24, %s27
      %p36 = scmp.eq.s32.totalorder %s19, 1
      %p37 = por %p35, %p36
      %p38 = scmp.ne.s32.totalorder %s27, %s28
      %p39 = scmp.eq.s32.totalorder %s19, 0
      %p40 = por %p38, %p39
      %p41 = scmp.ne.s32.totalorder %s27, %s28
      %p42 = scmp.eq.s32.totalorder %s20, 1
      %p43 = por %p41, %p42
      %p45 = scmp.ne.s32.totalorder %s28, %s44
      %p46 = scmp.eq.s32.totalorder %s20, 0
      %p47 = por %p45, %p46
      %s49 = sadd.s32 %s48, 1
      %p52 = scmp.eq.s32.totalorder %s14, 1
      %p53 = scmp.ne.s32.totalorder %s48, %s50
      %p54 = scmp.eq.s32.totalorder %s14, 0
      %p55 = por %p53, %p54
      %p56 = scmp.ne.s32.totalorder %s48, %s50
      %p57 = scmp.eq.s32.totalorder %s19, 1
      %p58 = por %p56, %p57
      %p59 = scmp.ne.s32.totalorder %s50, %s51
      %p60 = scmp.eq.s32.totalorder %s19, 0
      %p61 = por %p59, %p60
      %p62 = scmp.ne.s32.totalorder %s50, %s51
      %p63 = scmp.eq.s32.totalorder %s20, 1
      %p64 = por %p62, %p63
      %p66 = scmp.ne.s32.totalorder %s51, %s65
      %p67 = scmp.eq.s32.totalorder %s20, 0
      %p68 = por %p66, %p67
      %s70 = sadd.s32 %s69, 1
      %p73 = scmp.eq.s32.totalorder %s14, 1
      %p74 = scmp.ne.s32.totalorder %s69, %s71
      %p75 = scmp.eq.s32.totalorder %s14, 0
      %p76 = por %p74, %p75
      %p77 = scmp.ne.s32.totalorder %s69, %s71
      %p78 = scmp.eq.s32.totalorder %s19, 1
      %p79 = por %p77, %p78
      %p80 = scmp.ne.s32.totalorder %s71, %s72
      %p81 = scmp.eq.s32.totalorder %s19, 0
      %p82 = por %p80, %p81
      %p83 = scmp.ne.s32.totalorder %s71, %s72
      %p84 = scmp.eq.s32.totalorder %s20, 1
      %p85 = por %p83, %p84
      %p87 = scmp.ne.s32.totalorder %s72, %s86
      %p88 = scmp.eq.s32.totalorder %s20, 0
      %p89 = por %p87, %p88
      %s91 = sadd.s32 %s90, 1
      %p94 = scmp.eq.s32.totalorder %s14, 1
      %p95 = scmp.ne.s32.totalorder %s90, %s92
      %p96 = scmp.eq.s32.totalorder %s14, 0
      %p97 = por %p95, %p96
      %p98 = scmp.ne.s32.totalorder %s90, %s92
      %p99 = scmp.eq.s32.totalorder %s19, 1
      %p100 = por %p98, %p99
      %p101 = scmp.ne.s32.totalorder %s92, %s93
      %p102 = scmp.eq.s32.totalorder %s19, 0
      %p103 = por %p101, %p102
      %p104 = scmp.ne.s32.totalorder %s92, %s93
      %p105 = scmp.eq.s32.totalorder %s20, 1
      %p106 = por %p104, %p105
      %p108 = scmp.ne.s32.totalorder %s93, %s107
      %p109 = scmp.eq.s32.totalorder %s20, 0
      %p110 = por %p108, %p109
      %s112 = sadd.s32 %s111, 1
      %p115 = scmp.eq.s32.totalorder %s14, 1
      %p116 = scmp.ne.s32.totalorder %s111, %s113
      %p117 = scmp.eq.s32.totalorder %s14, 0
      %p118 = por %p116, %p117
      %p119 = scmp.ne.s32.totalorder %s111, %s113
      %p120 = scmp.eq.s32.totalorder %s19, 1
      %p121 = por %p119, %p120
      %p122 = scmp.ne.s32.totalorder %s113, %s114
      %p123 = scmp.eq.s32.totalorder %s19, 0
      %p124 = por %p122, %p123
      %p125 = scmp.ne.s32.totalorder %s113, %s114
      %p126 = scmp.eq.s32.totalorder %s20, 1
      %p127 = por %p125, %p126
      %p129 = scmp.ne.s32.totalorder %s114, %s128
      %p130 = scmp.eq.s32.totalorder %s20, 0
      %p131 = por %p129, %p130
      %s132 = ssub.s32 %s14, %s21
      %p133 = scmp.eq.s32.totalorder %s132, 0
      %s135 = sadd.s32 %s134, 1
      %s136 = scalar_select %p133, %s134, %s135
      %p139 = pneg %p133
      %p140 = scmp.eq.s32.totalorder %s14, 1
      %p141 = por %p139, %p140
      %p142 = scmp.ne.s32.totalorder %s134, %s137
      %p143 = scmp.eq.s32.totalorder %s14, 0
      %p144 = por %p142, %p143
      %p145 = scmp.ne.s32.totalorder %s134, %s137
      %p146 = scmp.eq.s32.totalorder %s19, 1
      %p147 = por %p145, %p146
      %p148 = scmp.ne.s32.totalorder %s137, %s138
      %p149 = scmp.eq.s32.totalorder %s19, 0
      %p150 = por %p148, %p149
      %p151 = scmp.ne.s32.totalorder %s137, %s138
      %p152 = scmp.eq.s32.totalorder %s20, 1
      %p153 = por %p151, %p152
      %p155 = scmp.ne.s32.totalorder %s138, %s154
      %p156 = scmp.eq.s32.totalorder %s20, 0
      %p157 = por %p155, %p156
      %p158 = scmp.le.s32.totalorder 1, %s14
      %p159 = scmp.lt.s32.totalorder %s14, 3
      %p160 = pnand %p158, %p159
      %p161 = pneg %p160
      // Predicated region
      $region9: #{tpu_custom_call.1} parent=5 // pred_check
        _
      $region10: #{tpu_custom_call.1} parent=5 // pred_check_branch
        %163 = sbr.rel (%p160) target = $region12
      $region11: #{tpu_custom_call.1} parent=5 // pred_region
        %s164 = ssub.s32 %s14, 1
        // Predicated region
        $region13: #{tpu_custom_call.1} parent=11 // pred_check
          %p165 = pneg %p61
        $region14: #{tpu_custom_call.1} parent=11 // pred_check_branch
          %167 = sbr.rel (%p165) target = $region16
        $region15: #{tpu_custom_call.1} parent=11 // pred_region
          _
        $region16: #{tpu_custom_call.1} parent=11 // pred_fallthru
          _
        // Predicated region
        $region17: #{tpu_custom_call.1} parent=11 // pred_check
          %p168 = pneg %p82
        $region18: #{tpu_custom_call.1} parent=11 // pred_check_branch
          %170 = sbr.rel (%p168) target = $region20
        $region19: #{tpu_custom_call.1} parent=11 // pred_region
          _
        $region20: #{tpu_custom_call.1} parent=11 // pred_fallthru
          _
        // Predicated region
        $region21: #{tpu_custom_call.1} parent=11 // pred_check
          %p171 = pneg %p103
        $region22: #{tpu_custom_call.1} parent=11 // pred_check_branch
          %173 = sbr.rel (%p171) target = $region24
        $region23: #{tpu_custom_call.1} parent=11 // pred_region
          _
        $region24: #{tpu_custom_call.1} parent=11 // pred_fallthru
          _
        // Predicated region
        $region25: #{tpu_custom_call.1} parent=11 // pred_check
          %p174 = pneg %p124
        $region26: #{tpu_custom_call.1} parent=11 // pred_check_branch
          %176 = sbr.rel (%p174) target = $region28
        $region27: #{tpu_custom_call.1} parent=11 // pred_region
          _
        $region28: #{tpu_custom_call.1} parent=11 // pred_fallthru
          _
      $region12: #{tpu_custom_call.1} parent=5 // pred_fallthru
        _
      %p177 = scmp.lt.s32.totalorder %s14, 2
      // Predicated region
      $region29: #{tpu_custom_call.1} parent=5 // pred_check
        %p178 = pneg %p177
      $region30: #{tpu_custom_call.1} parent=5 // pred_check_branch
        %180 = sbr.rel (%p178) target = $region32
      $region31: #{tpu_custom_call.1} parent=5 // pred_region
        // Predicated region
        $region33: #{tpu_custom_call.1} parent=31 // pred_check
          %p181 = pneg %p34
        $region34: #{tpu_custom_call.1} parent=31 // pred_check_branch
          %183 = sbr.rel (%p181) target = $region36
        $region35: #{tpu_custom_call.1} parent=31 // pred_region
          %p184 = scmp.lt.s32.totalorder %s14, 1
          %s185 = scalar_select %p184, %s14, 1
          %s186 = smul.addr %s185, 16
          %s187 = smul.addr %s186, 4
          %s188 = scalar_lea.vmem %s0, %s187
        $region36: #{tpu_custom_call.1} parent=31 // pred_fallthru
          _
      $region32: #{tpu_custom_call.1} parent=5 // pred_fallthru
        _
      %p189 = scmp.le.s32.totalorder 1, %s14
      %p190 = scmp.lt.s32.totalorder %s14, 3
      %p191 = pnand %p189, %p190
      %p192 = pneg %p191
      // Predicated region
      $region37: #{tpu_custom_call.1} parent=5 // pred_check
        _
      $region38: #{tpu_custom_call.1} parent=5 // pred_check_branch
        %194 = sbr.rel (%p191) target = $region40
      $region39: #{tpu_custom_call.1} parent=5 // pred_region
        %s195 = ssub.s32 %s14, 1
        %p196 = scmp.lt.s32.totalorder %s19, 1
        %s197 = scalar_select %p196, %s19, 1
        %s198 = smul.addr %s197, 16
        %s199 = smul.addr %s198, 4
        %s200 = scalar_lea.vmem %s0, %s199
        %p201 = pneg %p40
        %p202 = pneg %p37
        %p203 = pneg %p61
        %p204 = pneg %p58
        %p205 = pneg %p82
        %p206 = pneg %p79
        %p207 = pneg %p103
        %p208 = pneg %p100
        %p209 = pneg %p124
        %p210 = pneg %p121
        %p211 = pneg %p150
        %p212 = pneg %p147
        %s213 = sand.u32 %s137, 1
        %s214 = scalar_lea.sflag [#allocation3], %s213
        %s215 = sand.u32 %s137, 1
        %s216 = smul.addr %s215, 64
        %s217 = scalar_lea.vmem [#allocation2], %s216
        %p218 = scmp.lt.s32.totalorder %s19, 1
        %s219 = scalar_select %p218, %s19, 1
        %s220 = smul.addr %s219, 16
        %s221 = smul.addr %s220, 4
        %s222 = scalar_lea.vmem %s0, %s221
        %v224 = vld [vmem:[%s1] sm:$0xf]
        %v225 = vld [vmem:[%s1 + $0x4] sm:$0xf]
        %v226 = vld [vmem:[%s1 + $0x8] sm:$0xf]
        %v227 = vld [vmem:[%s1 + $0xc] sm:$0xf]
        %v228 = vld [vmem:[%s1 + $0x10] sm:$0xf]
        %v229 = vld [vmem:[%s1 + $0x14] sm:$0xf]
        %v230 = vld [vmem:[%s1 + $0x18] sm:$0xf]
        %v231 = vld [vmem:[%s1 + $0x1c] sm:$0xf]
        %v232 = vld [vmem:[%s222] sm:$0xff]
        %v233 = vld [vmem:[%s222 + $0x8] sm:$0xff]
        %v234 = vld [vmem:[%s222 + $0x10] sm:$0xff]
        %v235 = vld [vmem:[%s222 + $0x18] sm:$0xff]
        %v236 = vld [vmem:[%s222 + $0x20] sm:$0xff]
        %v237 = vld [vmem:[%s222 + $0x28] sm:$0xff]
        %v238 = vld [vmem:[%s222 + $0x30] sm:$0xff]
        %v239 = vld [vmem:[%s222 + $0x38] sm:$0xff]
        %v240 = vld [vmem:[%s2] sm:$0xff]
        %v241 = vld [vmem:[%s2 + $0x8] sm:$0xff]
        %v242 = vld [vmem:[%s2 + $0x10] sm:$0xff]
        %v243 = vld [vmem:[%s2 + $0x18] sm:$0xff]
        %v244 = vld [vmem:[%s2 + $0x20] sm:$0xff]
        %v245 = vld [vmem:[%s2 + $0x28] sm:$0xff]
        %v246 = vld [vmem:[%s2 + $0x30] sm:$0xff]
        %v247 = vld [vmem:[%s2 + $0x38] sm:$0xff]
        %249 = vset.pattern.permute.xlu0 0
        %250 = vperm.xlu0 %249, %v240
        %v251 = vpop.permute.xlu0 %250
        %254 = vset.pattern.permute.xlu0 0
        %255 = vperm.xlu0 %254, %v241
        %v256 = vpop.permute.xlu0 %255
        %259 = vset.pattern.permute.xlu0 0
        %260 = vperm.xlu0 %259, %v242
        %v261 = vpop.permute.xlu0 %260
        %264 = vset.pattern.permute.xlu0 0
        %265 = vperm.xlu0 %264, %v243
        %v266 = vpop.permute.xlu0 %265
        %269 = vset.pattern.permute.xlu0 0
        %270 = vperm.xlu0 %269, %v244
        %v271 = vpop.permute.xlu0 %270
        %274 = vset.pattern.permute.xlu0 0
        %275 = vperm.xlu0 %274, %v245
        %v276 = vpop.permute.xlu0 %275
        %279 = vset.pattern.permute.xlu0 0
        %280 = vperm.xlu0 %279, %v246
        %v281 = vpop.permute.xlu0 %280
        %284 = vset.pattern.permute.xlu0 0
        %285 = vperm.xlu0 %284, %v247
        %v286 = vpop.permute.xlu0 %285
        %v296 = vunpack.c.l.b16 %v224
        %v297 = vunpack.c.l.b16 %v225
        %v298 = vunpack.c.l.b16 %v226
        %v299 = vunpack.c.l.b16 %v227
        %v300 = vunpack.c.l.b16 %v228
        %v301 = vunpack.c.l.b16 %v229
        %v302 = vunpack.c.l.b16 %v230
        %v303 = vunpack.c.l.b16 %v231
        %v304 = vpack.c.b16 %v297, %v296
        %v305 = vpack.c.b16 %v299, %v298
        %v306 = vpack.c.b16 %v301, %v300
        %v307 = vpack.c.b16 %v303, %v302
        %v316 = vunpack.c.l.b16 %v232
        %v317 = vunpack.c.h.b16 %v232
        %v318 = vunpack.c.l.b16 %v233
        %v319 = vunpack.c.h.b16 %v233
        %v320 = vunpack.c.l.b16 %v234
        %v321 = vunpack.c.h.b16 %v234
        %v322 = vunpack.c.l.b16 %v235
        %v323 = vunpack.c.h.b16 %v235
        %v324 = vunpack.c.l.b16 %v236
        %v325 = vunpack.c.h.b16 %v236
        %v326 = vunpack.c.l.b16 %v237
        %v327 = vunpack.c.h.b16 %v237
        %v328 = vunpack.c.l.b16 %v238
        %v329 = vunpack.c.h.b16 %v238
        %v330 = vunpack.c.l.b16 %v239
        %v331 = vunpack.c.h.b16 %v239
        %v332 = vpack.c.b16 %v318, %v316
        %v333 = vpack.c.b16 %v319, %v317
        %v334 = vpack.c.b16 %v322, %v320
        %v335 = vpack.c.b16 %v323, %v321
        %v336 = vpack.c.b16 %v326, %v324
        %v337 = vpack.c.b16 %v327, %v325
        %v338 = vpack.c.b16 %v330, %v328
        %v339 = vpack.c.b16 %v331, %v329
        %vm348 = vcmask 523264
        %v350 = vsel %vm348, %v304, 0
        %v353 = vsel %vm348, %v305, 0
        %v356 = vsel %vm348, %v306, 0
        %v359 = vsel %vm348, %v307, 0
        %361 = vmatprep.subr.bf16.mxu0 %v333
        %362 = vmatpush1.bf16.msra.mxu0 %v332
        %363 = vmatprep.subr.bf16.mxu0 %v335
        %364 = vmatpush1.bf16.msra.mxu0 %v334
        %365 = vmatprep.subr.bf16.mxu0 %v337
        %366 = vmatpush1.bf16.msra.mxu0 %v336
        %367 = vmatprep.subr.bf16.mxu0 %v339
        %368 = vmatpush1.bf16.msra.mxu0 %v338
        %369 = vmatprep.subr.bf16.mxu0 0
        %370 = vmatpush1.bf16.msra.mxu0 0
        %371 = vmatprep.subr.bf16.mxu0 0
        %372 = vmatpush1.bf16.msra.mxu0 0
        %373 = vmatprep.subr.bf16.mxu0 0
        %374 = vmatpush1.bf16.msra.mxu0 0
        %375 = vmatprep.subr.bf16.mxu0 0
        %376 = vmatpush1.bf16.msra.mxu0 0
        %377 = vmatprep.subr.bf16.mxu0 0
        %378 = vmatpush1.bf16.msra.mxu0 0
        %379 = vmatprep.subr.bf16.mxu0 0
        %380 = vmatpush1.bf16.msra.mxu0 0
        %381 = vmatprep.subr.bf16.mxu0 0
        %382 = vmatpush1.bf16.msra.mxu0 0
        %383 = vmatprep.subr.bf16.mxu0 0
        %384 = vmatpush1.bf16.msra.mxu0 0
        %385 = vmatprep.subr.bf16.mxu0 0
        %386 = vmatpush1.bf16.msra.mxu0 0
        %387 = vmatprep.subr.bf16.mxu0 0
        %388 = vmatpush1.bf16.msra.mxu0 0
        %389 = vmatprep.subr.bf16.mxu0 0
        %390 = vmatpush1.bf16.msra.mxu0 0
        %391 = vmatprep.subr.bf16.mxu0 0
        %392 = vmatpush1.bf16.msra.mxu0 0
        %393 = vmatprep.mubr.bf16.mxu0 0
        %394 = vmatmul.mubr.bf16.gmra.mrb[0].mxu0 %v350
        %v395 = vpop.f32.mrb[0].mxu0
        %v396 = vadd.f32 %v251, %v395
        %v397 = vpop.f32.mrb[0].mxu0
        %v398 = vadd.f32 %v251, %v397
        %v399 = vpop.f32.mrb[0].mxu0
        %v400 = vadd.f32 %v256, %v399
        %v401 = vpop.f32.mrb[0].mxu0
        %v402 = vadd.f32 %v256, %v401
        %403 = vmatprep.mubr.bf16.mxu0 0
        %404 = vmatmul.mubr.bf16.gmra.mrb[0].mxu0 %v353
        %v405 = vpop.f32.mrb[0].mxu0
        %v406 = vadd.f32 %v261, %v405
        %v407 = vpop.f32.mrb[0].mxu0
        %v408 = vadd.f32 %v261, %v407
        %v409 = vpop.f32.mrb[0].mxu0
        %v410 = vadd.f32 %v266, %v409
        %v411 = vpop.f32.mrb[0].mxu0
        %v412 = vadd.f32 %v266, %v411
        %413 = vmatprep.mubr.bf16.mxu0 0
        %414 = vmatmul.mubr.bf16.gmra.mrb[0].mxu0 %v356
        %v415 = vpop.f32.mrb[0].mxu0
        %v416 = vadd.f32 %v271, %v415
        %v417 = vpop.f32.mrb[0].mxu0
        %v418 = vadd.f32 %v271, %v417
        %v419 = vpop.f32.mrb[0].mxu0
        %v420 = vadd.f32 %v276, %v419
        %v421 = vpop.f32.mrb[0].mxu0
        %v422 = vadd.f32 %v276, %v421
        %423 = vmatprep.mubr.bf16.mxu0 0
        %424 = vmatmul.mubr.bf16.gmra.mrb[0].mxu0 %v359
        %v425 = vpop.f32.mrb[0].mxu0
        %v426 = vadd.f32 %v281, %v425
        %v427 = vpop.f32.mrb[0].mxu0
        %v428 = vadd.f32 %v281, %v427
        %v429 = vpop.f32.mrb[0].mxu0
        %v430 = vadd.f32 %v286, %v429
        %v431 = vpop.f32.mrb[0].mxu0
        %v432 = vadd.f32 %v286, %v431
        %433 = vdwg.mxu0
        %v434 = vmax.f32 %v396, 0.0
        %v435 = vmax.f32 %v398, 0.0
        %v436 = vmax.f32 %v400, 0.0
        %v437 = vmax.f32 %v402, 0.0
        %v438 = vmax.f32 %v406, 0.0
        %v439 = vmax.f32 %v408, 0.0
        %v440 = vmax.f32 %v410, 0.0
        %v441 = vmax.f32 %v412, 0.0
        %v442 = vmax.f32 %v416, 0.0
        %v443 = vmax.f32 %v418, 0.0
        %v444 = vmax.f32 %v420, 0.0
        %v445 = vmax.f32 %v422, 0.0
        %v446 = vmax.f32 %v426, 0.0
        %v447 = vmax.f32 %v428, 0.0
        %v448 = vmax.f32 %v430, 0.0
        %v449 = vmax.f32 %v432, 0.0
        %v450 = vld [vmem:[%s3] sm:$0xf]
        %v451 = vld [vmem:[%s3 + $0x4] sm:$0xf]
        %v452 = vld [vmem:[%s3 + $0x8] sm:$0xf]
        %v453 = vld [vmem:[%s3 + $0xc] sm:$0xf]
        %v454 = vld [vmem:[%s3 + $0x10] sm:$0xf]
        %v455 = vld [vmem:[%s3 + $0x14] sm:$0xf]
        %v456 = vld [vmem:[%s3 + $0x18] sm:$0xf]
        %v457 = vld [vmem:[%s3 + $0x1c] sm:$0xf]
        %v458 = vld [vmem:[%s3 + $0x20] sm:$0xf]
        %v459 = vld [vmem:[%s3 + $0x24] sm:$0xf]
        %v460 = vpack.c.bf16 %v436, %v434
        %v461 = vpack.c.bf16 %v437, %v435
        %v462 = vpack.c.bf16 %v440, %v438
        %v463 = vpack.c.bf16 %v441, %v439
        %v464 = vpack.c.bf16 %v444, %v442
        %v465 = vpack.c.bf16 %v445, %v443
        %v466 = vpack.c.bf16 %v448, %v446
        %v467 = vpack.c.bf16 %v449, %v447
        %v468 = vld [vmem:[%s4] sm:$0xff]
        %v469 = vld [vmem:[%s4 + $0x8] sm:$0xff]
        %v470 = vld [vmem:[%s4 + $0x10] sm:$0xff]
        %v471 = vld [vmem:[%s4 + $0x18] sm:$0xff]
        %v472 = vld [vmem:[%s4 + $0x20] sm:$0xff]
        %v473 = vld [vmem:[%s4 + $0x28] sm:$0xff]
        %v474 = vld [vmem:[%s4 + $0x30] sm:$0xff]
        %v475 = vld [vmem:[%s4 + $0x38] sm:$0xff]
        %v476 = vld [vmem:[%s4 + $0x40] sm:$0xff]
        %v477 = vld [vmem:[%s4 + $0x48] sm:$0xff]
        %479 = vset.pattern.permute.xlu0 0
        %480 = vperm.xlu0 %479, %v468
        %v481 = vpop.permute.xlu0 %480
        %484 = vset.pattern.permute.xlu0 0
        %485 = vperm.xlu0 %484, %v469
        %v486 = vpop.permute.xlu0 %485
        %489 = vset.pattern.permute.xlu0 0
        %490 = vperm.xlu0 %489, %v470
        %v491 = vpop.permute.xlu0 %490
        %494 = vset.pattern.permute.xlu0 0
        %495 = vperm.xlu0 %494, %v471
        %v496 = vpop.permute.xlu0 %495
        %499 = vset.pattern.permute.xlu0 0
        %500 = vperm.xlu0 %499, %v472
        %v501 = vpop.permute.xlu0 %500
        %504 = vset.pattern.permute.xlu0 0
        %505 = vperm.xlu0 %504, %v473
        %v506 = vpop.permute.xlu0 %505
        %509 = vset.pattern.permute.xlu0 0
        %510 = vperm.xlu0 %509, %v474
        %v511 = vpop.permute.xlu0 %510
        %514 = vset.pattern.permute.xlu0 0
        %515 = vperm.xlu0 %514, %v475
        %v516 = vpop.permute.xlu0 %515
        %519 = vset.pattern.permute.xlu0 0
        %520 = vperm.xlu0 %519, %v476
        %v521 = vpop.permute.xlu0 %520
        %524 = vset.pattern.permute.xlu0 0
        %525 = vperm.xlu0 %524, %v477
        %v526 = vpop.permute.xlu0 %525
        %v538 = vunpack.c.l.b16 %v450
        %v539 = vunpack.c.l.b16 %v451
        %v540 = vunpack.c.l.b16 %v452
        %v541 = vunpack.c.l.b16 %v453
        %v542 = vunpack.c.l.b16 %v454
        %v543 = vunpack.c.l.b16 %v455
        %v544 = vunpack.c.l.b16 %v456
        %v545 = vunpack.c.l.b16 %v457
        %v546 = vunpack.c.l.b16 %v458
        %v547 = vunpack.c.l.b16 %v459
        %v548 = vpack.c.b16 %v539, %v538
        %v549 = vpack.c.b16 %v541, %v540
        %v550 = vpack.c.b16 %v543, %v542
        %v551 = vpack.c.b16 %v545, %v544
        %v552 = vpack.c.b16 %v547, %v546
        %v554 = vsel %vm348, %v548, 0
        %v557 = vsel %vm348, %v549, 0
        %v560 = vsel %vm348, %v550, 0
        %v563 = vsel %vm348, %v551, 0
        %v566 = vsel %vm348, %v552, 0
        %568 = vmatprep.subr.bf16.mxu0 %v461
        %569 = vmatpush1.bf16.msra.mxu0 %v460
        %570 = vmatprep.subr.bf16.mxu0 %v463
        %571 = vmatpush1.bf16.msra.mxu0 %v462
        %572 = vmatprep.subr.bf16.mxu0 %v465
        %573 = vmatpush1.bf16.msra.mxu0 %v464
        %574 = vmatprep.subr.bf16.mxu0 %v467
        %575 = vmatpush1.bf16.msra.mxu0 %v466
        %576 = vmatprep.subr.bf16.mxu0 0
        %577 = vmatpush1.bf16.msra.mxu0 0
        %578 = vmatprep.subr.bf16.mxu0 0
        %579 = vmatpush1.bf16.msra.mxu0 0
        %580 = vmatprep.subr.bf16.mxu0 0
        %581 = vmatpush1.bf16.msra.mxu0 0
        %582 = vmatprep.subr.bf16.mxu0 0
        %583 = vmatpush1.bf16.msra.mxu0 0
        %584 = vmatprep.subr.bf16.mxu0 0
        %585 = vmatpush1.bf16.msra.mxu0 0
        %586 = vmatprep.subr.bf16.mxu0 0
        %587 = vmatpush1.bf16.msra.mxu0 0
        %588 = vmatprep.subr.bf16.mxu0 0
        %589 = vmatpush1.bf16.msra.mxu0 0
        %590 = vmatprep.subr.bf16.mxu0 0
        %591 = vmatpush1.bf16.msra.mxu0 0
        %592 = vmatprep.subr.bf16.mxu0 0
        %593 = vmatpush1.bf16.msra.mxu0 0
        %594 = vmatprep.subr.bf16.mxu0 0
        %595 = vmatpush1.bf16.msra.mxu0 0
        %596 = vmatprep.subr.bf16.mxu0 0
        %597 = vmatpush1.bf16.msra.mxu0 0
        %598 = vmatprep.subr.bf16.mxu0 0
        %599 = vmatpush1.bf16.msra.mxu0 0
        %600 = vmatprep.mubr.bf16.mxu0 0
        %601 = vmatmul.mubr.bf16.gmra.mrb[0].mxu0 %v554
        %v602 = vpop.f32.mrb[0].mxu0
        %v603 = vadd.f32 %v481, %v602
        %v604 = vpop.f32.mrb[0].mxu0
        %v605 = vadd.f32 %v481, %v604
        %v606 = vpop.f32.mrb[0].mxu0
        %v607 = vadd.f32 %v486, %v606
        %v608 = vpop.f32.mrb[0].mxu0
        %v609 = vadd.f32 %v486, %v608
        %610 = vmatprep.mubr.bf16.mxu0 0
        %611 = vmatmul.mubr.bf16.gmra.mrb[0].mxu0 %v557
        %v612 = vpop.f32.mrb[0].mxu0
        %v613 = vadd.f32 %v491, %v612
        %v614 = vpop.f32.mrb[0].mxu0
        %v615 = vadd.f32 %v491, %v614
        %v616 = vpop.f32.mrb[0].mxu0
        %v617 = vadd.f32 %v496, %v616
        %v618 = vpop.f32.mrb[0].mxu0
        %v619 = vadd.f32 %v496, %v618
        %620 = vmatprep.mubr.bf16.mxu0 0
        %621 = vmatmul.mubr.bf16.gmra.mrb[0].mxu0 %v560
        %v622 = vpop.f32.mrb[0].mxu0
        %v623 = vadd.f32 %v501, %v622
        %v624 = vpop.f32.mrb[0].mxu0
        %v625 = vadd.f32 %v501, %v624
        %v626 = vpop.f32.mrb[0].mxu0
        %v627 = vadd.f32 %v506, %v626
        %v628 = vpop.f32.mrb[0].mxu0
        %v629 = vadd.f32 %v506, %v628
        %630 = vmatprep.mubr.bf16.mxu0 0
        %631 = vmatmul.mubr.bf16.gmra.mrb[0].mxu0 %v563
        %v632 = vpop.f32.mrb[0].mxu0
        %v633 = vadd.f32 %v511, %v632
        %v634 = vpop.f32.mrb[0].mxu0
        %v635 = vadd.f32 %v511, %v634
        %v636 = vpop.f32.mrb[0].mxu0
        %v637 = vadd.f32 %v516, %v636
        %v638 = vpop.f32.mrb[0].mxu0
        %v639 = vadd.f32 %v516, %v638
        %640 = vmatprep.mubr.bf16.mxu0 0
        %641 = vmatmul.mubr.bf16.gmra.mrb[0].mxu0 %v566
        %v642 = vpop.f32.mrb[0].mxu0
        %v643 = vadd.f32 %v521, %v642
        %v644 = vpop.f32.mrb[0].mxu0
        %v645 = vadd.f32 %v521, %v644
        %v646 = vpop.f32.mrb[0].mxu0
        %v647 = vadd.f32 %v526, %v646
        %v648 = vpop.f32.mrb[0].mxu0
        %v649 = vadd.f32 %v526, %v648
        %650 = vdwg.mxu0
        %v651 = vmul.f32 %v603, %v603
        %v652 = vmul.f32 %v605, %v605
        %v653 = vrot.slane %v651, 4
        %v654 = vadd.f32 %v651, %v653
        %v655 = vrot.slane %v654, 2
        %v656 = vadd.f32 %v654, %v655
        %v657 = vrot.slane %v656, 1
        %v658 = vadd.f32 %v656, %v657
        %v659 = vrot.slane %v652, 4
        %v660 = vadd.f32 %v652, %v659
        %v661 = vrot.slane %v660, 2
        %v662 = vadd.f32 %v660, %v661
        %v663 = vrot.slane %v662, 1
        %v664 = vadd.f32 %v662, %v663
        %v665 = vmax.f32 %v658, 1e-30
        %v666 = vmax.f32 %v664, 1e-30
        %v667 = vrsqrt.pop %v665
        %v668 = vrsqrt.pop %v666
        %v669 = vmul.f32 %v603, %v667
        %v670 = vmul.f32 %v605, %v668
        %v671 = vmul.f32 %v607, %v607
        %v672 = vmul.f32 %v609, %v609
        %v673 = vrot.slane %v671, 4
        %v674 = vadd.f32 %v671, %v673
        %v675 = vrot.slane %v674, 2
        %v676 = vadd.f32 %v674, %v675
        %v677 = vrot.slane %v676, 1
        %v678 = vadd.f32 %v676, %v677
        %v679 = vrot.slane %v672, 4
        %v680 = vadd.f32 %v672, %v679
        %v681 = vrot.slane %v680, 2
        %v682 = vadd.f32 %v680, %v681
        %v683 = vrot.slane %v682, 1
        %v684 = vadd.f32 %v682, %v683
        %v685 = vmax.f32 %v678, 1e-30
        %v686 = vmax.f32 %v684, 1e-30
        %v687 = vrsqrt.pop %v685
        %v688 = vrsqrt.pop %v686
        %v689 = vmul.f32 %v607, %v687
        %v690 = vmul.f32 %v609, %v688
        %v691 = vadd.f32 %v689, %v690
        %692 = vadd.xlane.f32.xlu0 %v691
        %v693 = vpop.xlane.xlu0 %692
        %v694 = vadd.f32 %v693, 1e-06
        %v695 = vmul.f32 %v669, %v694
        %v696 = vmul.f32 %v670, %v694
        %v697 = vrot.slane %v695, 4
        %v698 = vadd.f32 %v695, %v697
        %v699 = vrot.slane %v698, 2
        %v700 = vadd.f32 %v698, %v699
        %v701 = vrot.slane %v700, 1
        %v702 = vadd.f32 %v700, %v701
        %v703 = vrot.slane %v696, 4
        %v704 = vadd.f32 %v696, %v703
        %v705 = vrot.slane %v704, 2
        %v706 = vadd.f32 %v704, %v705
        %v707 = vrot.slane %v706, 1
        %v708 = vadd.f32 %v706, %v707
        %v709 = vadd.f32 %v702, 256.0
        %v710 = vadd.f32 %v708, 256.0
        %v711 = vrcp.pop %v709
        %v712 = vrcp.pop %v710
        %v713 = vadd.f32 %v613, %v615
        %714 = vadd.xlane.f32.xlu0 %v713
        %v715 = vpop.xlane.xlu0 %714
        %v716 = vadd.f32 %v617, %v619
        %717 = vadd.xlane.f32.xlu0 %v716
        %v718 = vpop.xlane.xlu0 %717
        %v719 = vadd.f32 %v623, %v625
        %720 = vadd.xlane.f32.xlu0 %v719
        %v721 = vpop.xlane.xlu0 %720
        %v722 = vadd.f32 %v627, %v629
        %723 = vadd.xlane.f32.xlu0 %v722
        %v724 = vpop.xlane.xlu0 %723
        %v725 = vadd.f32 %v633, %v635
        %726 = vadd.xlane.f32.xlu0 %v725
        %v727 = vpop.xlane.xlu0 %726
        %v728 = vadd.f32 %v637, %v639
        %729 = vadd.xlane.f32.xlu0 %v728
        %v730 = vpop.xlane.xlu0 %729
        %v731 = vadd.f32 %v643, %v645
        %732 = vadd.xlane.f32.xlu0 %v731
        %v733 = vpop.xlane.xlu0 %732
        %v734 = vadd.f32 %v647, %v649
        %735 = vadd.xlane.f32.xlu0 %v734
        %v736 = vpop.xlane.xlu0 %735
        %v737 = vpack.c.bf16 %v689, %v689
        %v738 = vpack.c.bf16 %v690, %v690
        %v739 = vpack.c.bf16 %v669, %v669
        %v740 = vpack.c.bf16 %v670, %v670
        %v741 = vpack.c.bf16 %v617, %v613
        %v742 = vpack.c.bf16 %v619, %v615
        %v743 = vpack.c.bf16 %v627, %v623
        %v744 = vpack.c.bf16 %v629, %v625
        %v745 = vpack.c.bf16 %v637, %v633
        %v746 = vpack.c.bf16 %v639, %v635
        %v747 = vpack.c.bf16 %v647, %v643
        %v748 = vpack.c.bf16 %v649, %v645
        %749 = vmatprep.subr.bf16.mxu0 %v738
        %750 = vmatpush1.bf16.xpose.msra.mxu0 %v737
        %751 = vmatprep.subr.bf16.mxu0 0
        %752 = vmatpush1.bf16.xpose.msra.mxu0 0
        %753 = vmatprep.subr.bf16.mxu0 0
        %754 = vmatpush1.bf16.xpose.msra.mxu0 0
        %755 = vmatprep.subr.bf16.mxu0 0
        %756 = vmatpush1.bf16.xpose.msra.mxu0 0
        %757 = vmatprep.subr.bf16.mxu0 0
        %758 = vmatpush1.bf16.xpose.msra.mxu0 0
        %759 = vmatprep.subr.bf16.mxu0 0
        %760 = vmatpush1.bf16.xpose.msra.mxu0 0
        %761 = vmatprep.subr.bf16.mxu0 0
        %762 = vmatpush1.bf16.xpose.msra.mxu0 0
        %763 = vmatprep.subr.bf16.mxu0 0
        %764 = vmatpush1.bf16.xpose.msra.mxu0 0
        %765 = vmatprep.subr.bf16.mxu0 0
        %766 = vmatpush1.bf16.xpose.msra.mxu0 0
        %767 = vmatprep.subr.bf16.mxu0 0
        %768 = vmatpush1.bf16.xpose.msra.mxu0 0
        %769 = vmatprep.subr.bf16.mxu0 0
        %770 = vmatpush1.bf16.xpose.msra.mxu0 0
        %771 = vmatprep.subr.bf16.mxu0 0
        %772 = vmatpush1.bf16.xpose.msra.mxu0 0
        %773 = vmatprep.subr.bf16.mxu0 0
        %774 = vmatpush1.bf16.xpose.msra.mxu0 0
        %775 = vmatprep.subr.bf16.mxu0 0
        %776 = vmatpush1.bf16.xpose.msra.mxu0 0
        %777 = vmatprep.subr.bf16.mxu0 0
        %778 = vmatpush1.bf16.xpose.msra.mxu0 0
        %779 = vmatprep.subr.bf16.mxu0 0
        %780 = vmatpush1.bf16.xpose.msra.mxu0 0
        %781 = vmatprep.mubr.bf16.mxu0 %v742
        %782 = vmatmul.mubr.bf16.gmra.mrb[0].mxu0 %v741
        %v783 = vpop.f32.mrb[0].mxu0
        %v784 = vadd.f32 0.0, %v783
        %v785 = vpop.f32.mrb[0].mxu0
        %v786 = vpop.f32.mrb[0].mxu0
        %v787 = vadd.f32 0.0, %v786
        %v788 = vpop.f32.mrb[0].mxu0
        %789 = vmatprep.mubr.bf16.mxu0 %v744
        %790 = vmatmul.mubr.bf16.gmra.mrb[0].mxu0 %v743
        %v791 = vpop.f32.mrb[0].mxu0
        %v792 = vadd.f32 0.0, %v791
        %v793 = vpop.f32.mrb[0].mxu0
        %v794 = vpop.f32.mrb[0].mxu0
        %v795 = vadd.f32 0.0, %v794
        %v796 = vpop.f32.mrb[0].mxu0
        %797 = vmatprep.mubr.bf16.mxu0 %v746
        %798 = vmatmul.mubr.bf16.gmra.mrb[0].mxu0 %v745
        %v799 = vpop.f32.mrb[0].mxu0
        %v800 = vadd.f32 0.0, %v799
        %v801 = vpop.f32.mrb[0].mxu0
        %v802 = vpop.f32.mrb[0].mxu0
        %v803 = vadd.f32 0.0, %v802
        %v804 = vpop.f32.mrb[0].mxu0
        %805 = vmatprep.mubr.bf16.mxu0 %v748
        %806 = vmatmul.mubr.bf16.gmra.mrb[0].mxu0 %v747
        %v807 = vpop.f32.mrb[0].mxu0
        %v808 = vadd.f32 0.0, %v807
        %v809 = vpop.f32.mrb[0].mxu0
        %v810 = vpop.f32.mrb[0].mxu0
        %v811 = vadd.f32 0.0, %v810
        %v812 = vpop.f32.mrb[0].mxu0
        %813 = vdwg.mxu0
        %v814 = vpack.c.bf16 %v787, %v784
        %v815 = vpack.c.bf16 %v795, %v792
        %v816 = vpack.c.bf16 %v803, %v800
        %v817 = vpack.c.bf16 %v811, %v808
        %vm818 = vcmask 64512
        %v820 = vsel %vm818, %v814, 0
        %v823 = vsel %vm818, %v815, 0
        %v826 = vsel %vm818, %v816, 0
        %v829 = vsel %vm818, %v817, 0
        %vm831 = vcmask 1043456
        %v833 = vsel %vm831, %v739, 0
        %v836 = vsel %vm831, %v740, 0
        %838 = vmatprep.subr.bf16.mxu0 %v836
        %839 = vmatpush1.bf16.msra.mxu0 %v833
        %840 = vmatprep.subr.bf16.mxu0 0
        %841 = vmatpush1.bf16.msra.mxu0 0
        %842 = vmatprep.subr.bf16.mxu0 0
        %843 = vmatpush1.bf16.msra.mxu0 0
        %844 = vmatprep.subr.bf16.mxu0 0
        %845 = vmatpush1.bf16.msra.mxu0 0
        %846 = vmatprep.subr.bf16.mxu0 0
        %847 = vmatpush1.bf16.msra.mxu0 0
        %848 = vmatprep.subr.bf16.mxu0 0
        %849 = vmatpush1.bf16.msra.mxu0 0
        %850 = vmatprep.subr.bf16.mxu0 0
        %851 = vmatpush1.bf16.msra.mxu0 0
        %852 = vmatprep.subr.bf16.mxu0 0
        %853 = vmatpush1.bf16.msra.mxu0 0
        %854 = vmatprep.subr.bf16.mxu0 0
        %855 = vmatpush1.bf16.msra.mxu0 0
        %856 = vmatprep.subr.bf16.mxu0 0
        %857 = vmatpush1.bf16.msra.mxu0 0
        %858 = vmatprep.subr.bf16.mxu0 0
        %859 = vmatpush1.bf16.msra.mxu0 0
        %860 = vmatprep.subr.bf16.mxu0 0
        %861 = vmatpush1.bf16.msra.mxu0 0
        %862 = vmatprep.subr.bf16.mxu0 0
        %863 = vmatpush1.bf16.msra.mxu0 0
        %864 = vmatprep.subr.bf16.mxu0 0
        %865 = vmatpush1.bf16.msra.mxu0 0
        %866 = vmatprep.subr.bf16.mxu0 0
        %867 = vmatpush1.bf16.msra.mxu0 0
        %868 = vmatprep.subr.bf16.mxu0 0
        %869 = vmatpush1.bf16.msra.mxu0 0
        %870 = vmatprep.mubr.bf16.mxu0 0
        %871 = vmatmul.mubr.bf16.gmra.mrb[0].mxu0 %v820
        %v872 = vpop.f32.mrb[0].mxu0
        %v873 = vadd.f32 %v715, %v872
        %v874 = vpop.f32.mrb[0].mxu0
        %v875 = vadd.f32 %v715, %v874
        %v876 = vpop.f32.mrb[0].mxu0
        %v877 = vadd.f32 %v718, %v876
        %v878 = vpop.f32.mrb[0].mxu0
        %v879 = vadd.f32 %v718, %v878
        %880 = vmatprep.mubr.bf16.mxu0 0
        %881 = vmatmul.mubr.bf16.gmra.mrb[0].mxu0 %v823
        %v882 = vpop.f32.mrb[0].mxu0
        %v883 = vadd.f32 %v721, %v882
        %v884 = vpop.f32.mrb[0].mxu0
        %v885 = vadd.f32 %v721, %v884
        %v886 = vpop.f32.mrb[0].mxu0
        %v887 = vadd.f32 %v724, %v886
        %v888 = vpop.f32.mrb[0].mxu0
        %v889 = vadd.f32 %v724, %v888
        %890 = vmatprep.mubr.bf16.mxu0 0
        %891 = vmatmul.mubr.bf16.gmra.mrb[0].mxu0 %v826
        %v892 = vpop.f32.mrb[0].mxu0
        %v893 = vadd.f32 %v727, %v892
        %v894 = vpop.f32.mrb[0].mxu0
        %v895 = vadd.f32 %v727, %v894
        %v896 = vpop.f32.mrb[0].mxu0
        %v897 = vadd.f32 %v730, %v896
        %v898 = vpop.f32.mrb[0].mxu0
        %v899 = vadd.f32 %v730, %v898
        %900 = vmatprep.mubr.bf16.mxu0 0
        %901 = vmatmul.mubr.bf16.gmra.mrb[0].mxu0 %v829
        %v902 = vpop.f32.mrb[0].mxu0
        %v903 = vadd.f32 %v733, %v902
        %v904 = vpop.f32.mrb[0].mxu0
        %v905 = vadd.f32 %v733, %v904
        %v906 = vpop.f32.mrb[0].mxu0
        %v907 = vadd.f32 %v736, %v906
        %v908 = vpop.f32.mrb[0].mxu0
        %v909 = vadd.f32 %v736, %v908
        %910 = vdwg.mxu0
        %v911 = vmul.f32 %v873, %v711
        %v912 = vmul.f32 %v875, %v712
        %v913 = vmul.f32 %v877, %v711
        %v914 = vmul.f32 %v879, %v712
        %v915 = vmul.f32 %v883, %v711
        %v916 = vmul.f32 %v885, %v712
        %v917 = vmul.f32 %v887, %v711
        %v918 = vmul.f32 %v889, %v712
        %v919 = vmul.f32 %v893, %v711
        %v920 = vmul.f32 %v895, %v712
        %v921 = vmul.f32 %v897, %v711
        %v922 = vmul.f32 %v899, %v712
        %v923 = vmul.f32 %v903, %v711
        %v924 = vmul.f32 %v905, %v712
        %v925 = vmul.f32 %v907, %v711
        %v926 = vmul.f32 %v909, %v712
        %v927 = vadd.f32 %v911, %v434
        %v928 = vadd.f32 %v912, %v435
        %v929 = vadd.f32 %v913, %v436
        %v930 = vadd.f32 %v914, %v437
        %v931 = vadd.f32 %v915, %v438
        %v932 = vadd.f32 %v916, %v439
        %v933 = vadd.f32 %v917, %v440
        %v934 = vadd.f32 %v918, %v441
        %v935 = vadd.f32 %v919, %v442
        %v936 = vadd.f32 %v920, %v443
        %v937 = vadd.f32 %v921, %v444
        %v938 = vadd.f32 %v922, %v445
        %v939 = vadd.f32 %v923, %v446
        %v940 = vadd.f32 %v924, %v447
        %v941 = vadd.f32 %v925, %v448
        %v942 = vadd.f32 %v926, %v449
        %v943 = vpack.c.bf16 %v929, %v927
        %v944 = vpack.c.bf16 %v930, %v928
        %v945 = vpack.c.bf16 %v933, %v931
        %v946 = vpack.c.bf16 %v934, %v932
        %v947 = vpack.c.bf16 %v937, %v935
        %v948 = vpack.c.bf16 %v938, %v936
        %v949 = vpack.c.bf16 %v941, %v939
        %v950 = vpack.c.bf16 %v942, %v940
        %v959 = vunpack.c.l.b16 %v943
        %v960 = vunpack.c.l.b16 %v944
        %v961 = vunpack.c.h.b16 %v943
        %v962 = vunpack.c.h.b16 %v944
        %v963 = vunpack.c.l.b16 %v945
        %v964 = vunpack.c.l.b16 %v946
        %v965 = vunpack.c.h.b16 %v945
        %v966 = vunpack.c.h.b16 %v946
        %v967 = vunpack.c.l.b16 %v947
        %v968 = vunpack.c.l.b16 %v948
        %v969 = vunpack.c.h.b16 %v947
        %v970 = vunpack.c.h.b16 %v948
        %v971 = vunpack.c.l.b16 %v949
        %v972 = vunpack.c.l.b16 %v950
        %v973 = vunpack.c.h.b16 %v949
        %v974 = vunpack.c.h.b16 %v950
        %v975 = vpack.c.b16 %v960, %v959
        %v976 = vpack.c.b16 %v962, %v961
        %v977 = vpack.c.b16 %v964, %v963
        %v978 = vpack.c.b16 %v966, %v965
        %v979 = vpack.c.b16 %v968, %v967
        %v980 = vpack.c.b16 %v970, %v969
        %v981 = vpack.c.b16 %v972, %v971
        %v982 = vpack.c.b16 %v974, %v973
        %991 = vst [vmem:[%s217] sm:$0xff] %v975
        %992 = vst [vmem:[%s217 + $0x8] sm:$0xff] %v976
        %993 = vst [vmem:[%s217 + $0x10] sm:$0xff] %v977
        %994 = vst [vmem:[%s217 + $0x18] sm:$0xff] %v978
        %995 = vst [vmem:[%s217 + $0x20] sm:$0xff] %v979
        %996 = vst [vmem:[%s217 + $0x28] sm:$0xff] %v980
        %997 = vst [vmem:[%s217 + $0x30] sm:$0xff] %v981
        %998 = vst [vmem:[%s217 + $0x38] sm:$0xff] %v982
        %s999 = sand.u32 %s137, 1
        %s1000 = scalar_lea.sflag [#allocation3], %s999
        %s1001 = sand.u32 %s137, 1
        %s1002 = smul.addr %s1001, 64
        %s1003 = scalar_lea.vmem [#allocation2], %s1002
        // Predicated region
        $region41: #{tpu_custom_call.1} parent=39 // pred_check
          %p1004 = pneg %p147
        $region42: #{tpu_custom_call.1} parent=39 // pred_check_branch
          %1006 = sbr.rel (%p1004) target = $region44
        $region43: #{tpu_custom_call.1} parent=39 // pred_region
          %s1008 = ssub.s32 1024, 1024
          %1009 = vsyncadd %s1000, %s1008
          %s1010 = smul.addr %s19, 16
          %s1011 = smul.addr %s1010, 64
          %s1012 = scalar_lea.hbm %s5, %s1011
          %s1013 = sshll.u32 %s1003, 4
          %s1014 = int_to_ptr.vmem [resolvable:$true] %s1013
          %1019 = dma.vmem_to_hbm [thread:$0]  %s1014, 1024, %s1012, %s1000, 128, 128, 8
        $region44: #{tpu_custom_call.1} parent=39 // pred_fallthru
          _
      $region40: #{tpu_custom_call.1} parent=5 // pred_fallthru
        _
      %p1020 = scmp.le.s32.totalorder 2, %s14
      // Predicated region
      $region45: #{tpu_custom_call.1} parent=5 // pred_check
        %p1021 = pneg %p1020
      $region46: #{tpu_custom_call.1} parent=5 // pred_check_branch
        %1023 = sbr.rel (%p1021) target = $region48
      $region47: #{tpu_custom_call.1} parent=5 // pred_region
        %s1024 = ssub.s32 %s14, 2
        // Predicated region
        $region49: #{tpu_custom_call.1} parent=47 // pred_check
          %p1025 = pneg %p153
        $region50: #{tpu_custom_call.1} parent=47 // pred_check_branch
          %1027 = sbr.rel (%p1025) target = $region52
        $region51: #{tpu_custom_call.1} parent=47 // pred_region
          %s1028 = sand.u32 %s138, 1
          %s1029 = scalar_lea.sflag [#allocation3], %s1028
          %s1030 = sand.u32 %s138, 1
          %s1031 = smul.addr %s1030, 64
          %s1032 = scalar_lea.vmem [#allocation2], %s1031
          %1033 = dma.done %s1029, 1024
        $region52: #{tpu_custom_call.1} parent=47 // pred_fallthru
          _
      $region48: #{tpu_custom_call.1} parent=5 // pred_fallthru
        _
    $region6: #{tpu_custom_call.1} parent=1 // loop_footer
      %s18 = sadd.s32 1, %s14
    $region7: #{tpu_custom_call.1} parent=1 // loop_footer_branch
      %13 = sbr.rel target = $region3
    $region8: #{tpu_custom_call.1} parent=1 // loop_exit
      _
    %1034 = vsyncpa [#allocation3], 1
    %s1035 = scalar_lea.sflag [#allocation3], 1
    %1036 = vsyncpa %s1035, 1

</llo_original>
